<compile_context>
chip_gen: v7x
topology: tpu7x:2x2x1
jax: 0.10.0
libtpu: 0.0.40
codegen_flags: <defaults>
</compile_context>

<pallas_src>
from functools import partial
from math import ceil

import numpy as np
import jax
import jax.numpy as jnp
from jax import lax
from jax.experimental import pallas as pl
from jax.experimental.pallas import tpu as pltpu


_MIB = 1024 * 1024
_GROUP_TARGET_BYTES = 2 * _MIB        # aim for >= ~2 MiB of DMA per grid step
_STEP_OVERHEAD_BYTES = 512 * 1024     # ~0.35 us per grid step, expressed as HBM bytes
_MAX_UNROLLED_PLANES = 16             # per-plane fill loop unroll cap (non-uniform fill)


def _round_down(x, m):
    return (x // m) * m


def _sublane_multiple(dtype):
    itemsize = jnp.dtype(dtype).itemsize
    # 8 rows for 32-bit, 16 for 16-bit, 32 for 8-bit (sublane packing).
    return max(8, 8 * (4 // max(1, itemsize)))


def _vmem_budget_bytes():
    """~75% of this generation's per-core VMEM (v5e/v6e: 128 MiB, v7x: 64 MiB)."""
    try:
        cap = int(pltpu.get_tpu_info().vmem_capacity_bytes)
    except Exception:                  # pragma: no cover - defensive fallback
        cap = 64 * _MIB                # conservative (v7x-sized) fallback
    return max(32 * _MIB, (cap * 3) // 4)


def _run_with_store_fallback(run):
    """Prefer lane-dense composed full-width stores; fall back to piecewise strip
    stores if the lane-concatenate composition fails to lower on this toolchain."""
    try:
        return run(True)
    except Exception:                  # pragma: no cover - lowering fallback only
        return run(False)


# ----------------------------------------------------------------------------
# Kernels
# ----------------------------------------------------------------------------

def _pad_plane_kernel(fill_ref, x_ref, o_ref, *, top, left, h, w, out_h, out_w,
                      planes, static_fill, compose):
    """One grid step = `planes` whole (n, c) planes.  Border strips are filled,
    the interior is copied once; every output element is written exactly once."""
    dt = o_ref.dtype
    bottom = out_h - top - h
    right = out_w - left - w

    if static_fill is not None:
        # Uniform fill: block-wide stores across all `planes` at once.
        fill = static_fill
        if top > 0:
            o_ref[:, pl.ds(0, top), :] = jnp.full((planes, top, out_w), fill, dt)
        if bottom > 0:
            o_ref[:, pl.ds(top + h, bottom), :] = jnp.full((planes, bottom, out_w), fill, dt)
        x = x_ref[...]
        if compose and (left > 0 or right > 0):
            parts = []
            if left > 0:
                parts.append(jnp.full((planes, h, left), fill, dt))
            parts.append(x)
            if right > 0:
                parts.append(jnp.full((planes, h, right), fill, dt))
            o_ref[:, pl.ds(top, h), :] = jnp.concatenate(parts, axis=2)
        else:
            if left > 0:
                o_ref[:, pl.ds(top, h), pl.ds(0, left)] = jnp.full((planes, h, left), fill, dt)
            if right > 0:
                o_ref[:, pl.ds(top, h), pl.ds(left + w, right)] = jnp.full((planes, h, right), fill, dt)
            o_ref[:, pl.ds(top, h), pl.ds(left, w)] = x
        return

    # Per-channel fill: short static unroll, one SMEM scalar per plane.
    base = pl.program_id(0) * planes
    for p in range(planes):
        fill = fill_ref[base + p].astype(dt)
        if top > 0:
            o_ref[p, pl.ds(0, top), :] = jnp.full((top, out_w), fill, dt)
        if bottom > 0:
            o_ref[p, pl.ds(top + h, bottom), :] = jnp.full((bottom, out_w), fill, dt)
        x = x_ref[p]
        if compose and (left > 0 or right > 0):
            parts = []
            if left > 0:
                parts.append(jnp.full((h, left), fill, dt))
            parts.append(x)
            if right > 0:
                parts.append(jnp.full((h, right), fill, dt))
            o_ref[p, pl.ds(top, h), :] = jnp.concatenate(parts, axis=1)
        else:
            if left > 0:
                o_ref[p, pl.ds(top, h), pl.ds(0, left)] = jnp.full((h, left), fill, dt)
            if right > 0:
                o_ref[p, pl.ds(top, h), pl.ds(left + w, right)] = jnp.full((h, right), fill, dt)
            o_ref[p, pl.ds(top, h), pl.ds(left, w)] = x


def _pad_band_kernel(fill_ref, *refs, top, left, h, w, out_w, th, b, b_pad,
                     static_fill, compose):
    """One (th, out_w) output row-band of one plane per grid step.

    Input rows feeding output band k start at a static sub-block offset
    b = top % th inside the th-row input blocks.  When b > 0 the band is
    assembled from the tail of a small b_pad-row block (hi_ref) and the head
    of the matching th-row block (lo_ref).  Interior bands (fully inside the
    source image) take a mask-free copy path; border bands mask rows outside
    the valid input range to the fill value.  Every output element is stored
    exactly once.
    """
    if b > 0:
        hi_ref, lo_ref, o_ref = refs
    else:
        lo_ref, o_ref = refs
    dt = o_ref.dtype
    if static_fill is not None:
        fill = jnp.asarray(static_fill, dt)
    else:
        fill = fill_ref[pl.program_id(0)].astype(dt)
    right = out_w - left - w
    row0 = pl.program_id(1) * th          # first global output row of this band

    def data_rows(masked):
        if b > 0:
            rows = jnp.concatenate(
                [hi_ref[pl.ds(b_pad - b, b), :], lo_ref[pl.ds(0, th - b), :]], axis=0)
        else:
            rows = lo_ref[...]
        if masked:
            gi = row0 - top + lax.broadcasted_iota(jnp.int32, (th, 1), 0)
            rows = jnp.where((gi >= 0) & (gi < h), rows, fill)
        return rows

    def store(rows):
        if compose and (left > 0 or right > 0):
            parts = []
            if left > 0:
                parts.append(jnp.full((th, left), fill, dt))
            parts.append(rows)
            if right > 0:
                parts.append(jnp.full((th, right), fill, dt))
            o_ref[...] = jnp.concatenate(parts, axis=1)
        else:
            if left > 0:
                o_ref[:, pl.ds(0, left)] = jnp.full((th, left), fill, dt)
            if right > 0:
                o_ref[:, pl.ds(left + w, right)] = jnp.full((th, right), fill, dt)
            o_ref[:, pl.ds(left, w)] = rows

    interior = (row0 >= top) & (row0 + th <= top + h)

    @pl.when(interior)
    def _():
        store(data_rows(masked=False))

    @pl.when(jnp.logical_not(interior))
    def _():
        store(data_rows(masked=True))


# ----------------------------------------------------------------------------
# Band-height selection (host side)
# ----------------------------------------------------------------------------

def _min_bpad(th, b, row_mult):
    """Smallest multiple of row_mult dividing th with value >= b (th always works)."""
    d = row_mult
    while d < th:
        if th % d == 0 and d >= b:
            return d
        d += row_mult
    return th


def _choose_band(h, top, w, out_w, out_h, itemsize, row_mult, band_budget, band_rows):
    """Pick the output row-band height (and hi-block size) for the banded path."""
    max_th = _round_down(h, row_mult)
    if band_rows is not None:                    # explicit override (tests / tuning)
        th = max(row_mult, min(_round_down(band_rows, row_mult), max_th))
        b = top % th
        return th, b, (_min_bpad(th, b, row_mult) if b else 0)
    # Largest th whose (lo + hi + out) per-step block still fits the budget.
    row_bytes = (2 * w + out_w) * itemsize       # conservative: hi block <= th rows
    max_th = min(max_th, max(row_mult, _round_down(band_budget // row_bytes, row_mult)))
    best = None
    for th_c in range(row_mult, max_th + 1, row_mult):
        b_c = top % th_c
        bp_c = _min_bpad(th_c, b_c, row_mult) if b_c else 0
        steps = -(-out_h // th_c)
        cost = steps * ((th_c * (w + out_w) + bp_c * w) * itemsize + _STEP_OVERHEAD_BYTES)
        if best is None or cost <= best[0]:      # ties -> prefer the larger band
            best = (cost, th_c, b_c, bp_c)
    return best[1], best[2], best[3]


# ----------------------------------------------------------------------------
# Wrapper
# ----------------------------------------------------------------------------

def pad_to_size(image, size, fill=0, *, band_rows=None):
    """Pallas TPU implementation of PadToSize.forward for NCHW tensors.

    Args:
      image: jnp.ndarray of shape (N, C, H, W).
      size: (target_height, target_width); dims already >= target are untouched.
      fill: scalar or length-C tuple; rounded/clamped to image.dtype for
        integer images.
      band_rows: optional row-band size for the banded path (tests/tuning);
        None selects automatically.
    """
    n, c, h, w = image.shape
    pad_h = max(size[0] - h, 0)
    pad_w = max(size[1] - w, 0)
    if pad_h == 0 and pad_w == 0:
        return image                               # nothing to pad: skip the HBM round trip

    left, top = pad_w // 2, pad_h // 2
    right, bottom = ceil(pad_w / 2), ceil(pad_h / 2)
    out_h, out_w = h + top + bottom, w + left + right

    dtype = image.dtype
    itemsize = jnp.dtype(dtype).itemsize
    row_mult = _sublane_multiple(dtype)
    vmem_budget = _vmem_budget_bytes()
    plane_budget = vmem_budget // 3                # ~32 MiB on v5e/v6e, ~16 MiB on v7x
    band_budget = min(vmem_budget // 4, 16 * _MIB)  # per-step (in+out+hi) block budget

    # Per-channel fill values, clamped/rounded on the host to the image dtype.
    fill_np = np.asarray(fill)
    if fill_np.ndim == 0:
        fill_np = np.full((c,), fill_np)
    assert fill_np.shape == (c,), "fill must be a scalar or have one entry per channel"
    if jnp.issubdtype(dtype, jnp.integer):
        if np.issubdtype(fill_np.dtype, np.floating):
            fill_np = np.rint(fill_np)             # explicit rounding, not truncation
        info = np.iinfo(np.dtype(dtype))
        fill_np = np.clip(fill_np, info.min, info.max)   # avoid silent wraparound
        smem_dtype = jnp.int32
    else:
        smem_dtype = jnp.float32
    uniform_fill = bool(np.all(fill_np == fill_np[0]))
    static_fill = fill_np[0].item() if uniform_fill else None
    fill_smem = jnp.asarray(np.tile(fill_np, n), dtype=smem_dtype)

    ncp = n * c
    x3 = image.reshape(ncp, h, w)
    out_shape = jax.ShapeDtypeStruct((ncp, out_h, out_w), dtype)
    cost = pl.CostEstimate(flops=0, transcendentals=0,
                           bytes_accessed=(h * w + out_h * out_w) * ncp * itemsize)

    plane_bytes = (h * w + out_h * out_w) * itemsize
    can_band = _round_down(h, row_mult) >= row_mult
    use_banded = can_band and ((band_rows is not None) or (plane_bytes > plane_budget))
    # TODO(synk): column-tiled fallback for h < sublane-multiple planes that still
    # exceed the VMEM plane budget (short-and-very-wide images).

    if not use_banded:
        # ---- whole-plane path: a group of `planes` planes per grid step -----
        max_planes = ncp if uniform_fill else min(ncp, _MAX_UNROLLED_PLANES)
        divisors = [d for d in range(1, max_planes + 1)
                    if ncp % d == 0 and d * plane_bytes <= plane_budget]
        if not divisors:
            planes = 1
        else:
            hit = [d for d in divisors if d * plane_bytes >= _GROUP_TARGET_BYTES]
            planes = min(hit) if hit else max(divisors)
        group_bytes = planes * plane_bytes
        vmem_limit = int(min(vmem_budget, max(16 * _MIB, 3 * group_bytes)))

        def run_plane(compose):
            return pl.pallas_call(
                partial(_pad_plane_kernel, top=top, left=left, h=h, w=w,
                        out_h=out_h, out_w=out_w, planes=planes,
                        static_fill=static_fill, compose=compose),
                out_shape=out_shape,
                grid=(ncp // planes,),
                in_specs=[
                    pl.BlockSpec(memory_space=pltpu.MemorySpace.SMEM),
                    pl.BlockSpec((planes, h, w), lambda i: (i, 0, 0)),
                ],
                out_specs=pl.BlockSpec((planes, out_h, out_w), lambda i: (i, 0, 0)),
                compiler_params=pltpu.CompilerParams(
                    dimension_semantics=("parallel",),
                    vmem_limit_bytes=vmem_limit),
                cost_estimate=cost,
            )(fill_smem, x3)

        out3 = _run_with_store_fallback(run_plane)
        return out3.reshape(n, c, out_h, out_w)

    # ---- row-banded path: lane-dense (th, out_w) output bands ---------------
    th, b, b_pad = _choose_band(h, top, w, out_w, out_h, itemsize, row_mult,
                                band_budget, band_rows)
    a = top // th
    ko = -(-out_h // th)                           # number of output row bands
    ki = -(-h // th)                               # number of th-row input blocks

    in_specs = [pl.BlockSpec(memory_space=pltpu.MemorySpace.SMEM)]
    call_args = [fill_smem]
    if b > 0:
        hi_stride = th // b_pad
        hi_last = -(-h // b_pad) - 1

        def hi_map(i, k, _a=a, _s=hi_stride, _last=hi_last):
            return (i, jnp.clip((k - _a) * _s - 1, 0, _last), 0)

        in_specs.append(pl.BlockSpec((None, b_pad, w), hi_map))
        call_args.append(x3)

    def lo_map(i, k, _a=a, _last=ki - 1):
        return (i, jnp.clip(k - _a, 0, _last), 0)

    in_specs.append(pl.BlockSpec((None, th, w), lo_map))
    call_args.append(x3)

    band_block_bytes = (th * (w + out_w) + b_pad * w) * itemsize
    vmem_limit = int(min(vmem_budget, max(16 * _MIB, 3 * band_block_bytes)))

    def run_band(compose):
        return pl.pallas_call(
            partial(_pad_band_kernel, top=top, left=left, h=h, w=w, out_w=out_w,
                    th=th, b=b, b_pad=b_pad, static_fill=static_fill,
                    compose=compose),
            out_shape=out_shape,
            grid=(ncp, ko),
            in_specs=in_specs,
            out_specs=pl.BlockSpec((None, th, out_w), lambda i, k: (i, k, 0)),
            compiler_params=pltpu.CompilerParams(
                # Bands are independent writes -> expose both axes to megacore.
                dimension_semantics=("parallel", "parallel"),
                vmem_limit_bytes=vmem_limit),
            cost_estimate=cost,
        )(*call_args)

    out3 = _run_with_store_fallback(run_band)
    return out3.reshape(n, c, out_h, out_w)


# ----------------------------------------------------------------------------
# Reference + tests
# ----------------------------------------------------------------------------

def _reference(image, size, fill):
    """NumPy reference with the same TF.pad split."""
    n, c, h, w = image.shape
    pad_h = max(size[0] - h, 0)
    pad_w = max(size[1] - w, 0)
    left, top = pad_w // 2, pad_h // 2
    right, bottom = ceil(pad_w / 2), ceil(pad_h / 2)
    fill_np = np.asarray(fill)
    if fill_np.ndim == 0:
        fill_np = np.full((c,), fill_np)
    img = np.asarray(image)
    planes = []
    for ci in range(c):
        planes.append(np.pad(img[:, ci], ((0, 0), (top, bottom), (left, right)),
                             constant_values=np.asarray(fill_np[ci], dtype=img.dtype)))
    return np.stack(planes, axis=1)


if __name__ == "__main__":
    key = jax.random.PRNGKey(0)
    k1, k2, k3, k4, k5 = jax.random.split(key, 5)

    # 1) Whole-plane path, per-channel float fill (non-uniform -> SMEM per-plane loop).
    x1 = jax.random.uniform(k1, (2, 3, 16, 16), dtype=jnp.float32)
    out1 = jax.block_until_ready(pad_to_size(x1, (24, 20), fill=(1.0, 2.0, 3.0)))
    np.testing.assert_allclose(np.asarray(out1),
                               _reference(x1, (24, 20), (1.0, 2.0, 3.0)), rtol=0, atol=0)

    # 2) Whole-plane path, uniform scalar fill (plane-batched block-wide stores).
    out2 = jax.block_until_ready(pad_to_size(x1, (24, 20), fill=0.5))
    np.testing.assert_allclose(np.asarray(out2), _reference(x1, (24, 20), 0.5),
                               rtol=0, atol=0)

    # 3) Row-banded path, unaligned top offset with b_pad == th.
    x3 = jax.random.uniform(k2, (1, 3, 40, 36), dtype=jnp.float32)
    out3 = jax.block_until_ready(pad_to_size(x3, (64, 48), fill=0.5, band_rows=16))
    np.testing.assert_allclose(np.asarray(out3), _reference(x3, (64, 48), 0.5),
                               rtol=0, atol=0)

    # 4) Row-banded path, small hi block (b_pad < th), per-channel fill,
    #    partial final band.
    x4 = jax.random.uniform(k3, (1, 2, 48, 20), dtype=jnp.float32)
    out4 = jax.block_until_ready(pad_to_size(x4, (56, 24), fill=(-1.5, 2.25), band_rows=32))
    np.testing.assert_allclose(np.asarray(out4),
                               _reference(x4, (56, 24), (-1.5, 2.25)), rtol=0, atol=0)

    # 5) Row-banded path, aligned top offset (b == 0), no width padding.
    x5 = jax.random.uniform(k4, (1, 2, 32, 24), dtype=jnp.float32)
    out5 = jax.block_until_ready(pad_to_size(x5, (64, 24), fill=0.25, band_rows=16))
    np.testing.assert_allclose(np.asarray(out5), _reference(x5, (64, 24), 0.25),
                               rtol=0, atol=0)

    # 6) Integer image, per-channel integer fill (whole-plane, non-uniform path).
    x6 = jax.random.randint(k5, (1, 3, 10, 12), 0, 256, dtype=jnp.int32)
    out6 = jax.block_until_ready(pad_to_size(x6, (16, 16), fill=(255, 128, 3)))
    np.testing.assert_array_equal(np.asarray(out6),
                                  _reference(x6, (16, 16), (255, 128, 3)))

    # 7) Early exit: target smaller than the image returns the input unchanged.
    out7 = pad_to_size(x1, (8, 8), fill=0)
    assert out7.shape == x1.shape
    np.testing.assert_array_equal(np.asarray(out7), np.asarray(x1))

    print("KERNEL_OK")
</pallas_src>

<mosaic_0001>
module attributes {stable_mosaic.version = 11 : i64} {
  func.func @_pad_plane_kernel(%arg0: i32, %arg1: memref<6xf32, #tpu.memory_space<smem>>, %arg2: memref<6x16x16xf32, #tpu.memory_space<vmem>>, %arg3: memref<6x24x20xf32, #tpu.memory_space<vmem>>) attributes {dimension_semantics = [#tpu.dimension_semantics<parallel>], iteration_bounds = array<i64: 1>, scalar_prefetch = 0 : i64, scratch_operands = 0 : i64, tpu.core_type = #tpu.core_type<tc>, window_params = [{transform_indices = @transform_0, window_bounds = array<i64: 6>}, {transform_indices = @transform_1, window_bounds = array<i64: 6, 16, 16>}, {transform_indices = @transform_2, window_bounds = array<i64: 6, 24, 20>}]} {
    %c6_i32 = arith.constant 6 : i32
    %0 = arith.muli %arg0, %c6_i32 : i32
    %c0_i32 = arith.constant 0 : i32
    %1 = arith.addi %0, %c0_i32 : i32
    %2 = arith.index_cast %1 : i32 to index
    %3 = memref.load %arg1[%2] : memref<6xf32, #tpu.memory_space<smem>>
    %4 = vector.broadcast %3 : f32 to vector<4x20xf32>
    %c0 = arith.constant 0 : index
    %c0_0 = arith.constant 0 : index
    %c0_1 = arith.constant 0 : index
    %5 = vector.load %arg3[%c0, %c0_0, %c0_1] : memref<6x24x20xf32, #tpu.memory_space<vmem>>, vector<1x4x20xf32>
    %6 = vector.shape_cast %5 : vector<1x4x20xf32> to vector<4x20xf32>
    %7 = vector.shape_cast %4 : vector<4x20xf32> to vector<1x4x20xf32>
    tpu.vector_store %arg3[%c0, %c0_0, %c0_1], %7 {strides = array<i32>} : memref<6x24x20xf32, #tpu.memory_space<vmem>>, vector<1x4x20xf32>,
    %8 = vector.broadcast %3 : f32 to vector<4x20xf32>
    %c0_2 = arith.constant 0 : index
    %c20 = arith.constant 20 : index
    %c0_3 = arith.constant 0 : index
    %9 = vector.load %arg3[%c0_2, %c20, %c0_3] : memref<6x24x20xf32, #tpu.memory_space<vmem>>, vector<1x4x20xf32>
    %10 = vector.shape_cast %9 : vector<1x4x20xf32> to vector<4x20xf32>
    %11 = vector.shape_cast %8 : vector<4x20xf32> to vector<1x4x20xf32>
    tpu.vector_store %arg3[%c0_2, %c20, %c0_3], %11 {strides = array<i32>} : memref<6x24x20xf32, #tpu.memory_space<vmem>>, vector<1x4x20xf32>,
    %c0_4 = arith.constant 0 : index
    %c0_5 = arith.constant 0 : index
    %c0_6 = arith.constant 0 : index
    %12 = vector.load %arg2[%c0_4, %c0_5, %c0_6] : memref<6x16x16xf32, #tpu.memory_space<vmem>>, vector<1x16x16xf32>
    %13 = vector.shape_cast %12 : vector<1x16x16xf32> to vector<16x16xf32>
    %14 = vector.broadcast %3 : f32 to vector<16x2xf32>
    %15 = vector.broadcast %3 : f32 to vector<16x2xf32>
    %16 = tpu.concatenate %14, %13, %15 in 1 : vector<16x2xf32>, vector<16x16xf32>, vector<16x2xf32> -> vector<16x20xf32>
    %c0_7 = arith.constant 0 : index
    %c4 = arith.constant 4 : index
    %c0_8 = arith.constant 0 : index
    %17 = vector.load %arg3[%c0_7, %c4, %c0_8] : memref<6x24x20xf32, #tpu.memory_space<vmem>>, vector<1x16x20xf32>
    %18 = vector.shape_cast %17 : vector<1x16x20xf32> to vector<16x20xf32>
    %19 = vector.shape_cast %16 : vector<16x20xf32> to vector<1x16x20xf32>
    tpu.vector_store %arg3[%c0_7, %c4, %c0_8], %19 {strides = array<i32>} : memref<6x24x20xf32, #tpu.memory_space<vmem>>, vector<1x16x20xf32>,
    %c1_i32 = arith.constant 1 : i32
    %20 = arith.addi %0, %c1_i32 : i32
    %21 = arith.index_cast %20 : i32 to index
    %22 = memref.load %arg1[%21] : memref<6xf32, #tpu.memory_space<smem>>
    %23 = vector.broadcast %22 : f32 to vector<4x20xf32>
    %c1 = arith.constant 1 : index
    %c0_9 = arith.constant 0 : index
    %c0_10 = arith.constant 0 : index
    %24 = vector.load %arg3[%c1, %c0_9, %c0_10] : memref<6x24x20xf32, #tpu.memory_space<vmem>>, vector<1x4x20xf32>
    %25 = vector.shape_cast %24 : vector<1x4x20xf32> to vector<4x20xf32>
    %26 = vector.shape_cast %23 : vector<4x20xf32> to vector<1x4x20xf32>
    tpu.vector_store %arg3[%c1, %c0_9, %c0_10], %26 {strides = array<i32>} : memref<6x24x20xf32, #tpu.memory_space<vmem>>, vector<1x4x20xf32>,
    %27 = vector.broadcast %22 : f32 to vector<4x20xf32>
    %c1_11 = arith.constant 1 : index
    %c20_12 = arith.constant 20 : index
    %c0_13 = arith.constant 0 : index
    %28 = vector.load %arg3[%c1_11, %c20_12, %c0_13] : memref<6x24x20xf32, #tpu.memory_space<vmem>>, vector<1x4x20xf32>
    %29 = vector.shape_cast %28 : vector<1x4x20xf32> to vector<4x20xf32>
    %30 = vector.shape_cast %27 : vector<4x20xf32> to vector<1x4x20xf32>
    tpu.vector_store %arg3[%c1_11, %c20_12, %c0_13], %30 {strides = array<i32>} : memref<6x24x20xf32, #tpu.memory_space<vmem>>, vector<1x4x20xf32>,
    %c1_14 = arith.constant 1 : index
    %c0_15 = arith.constant 0 : index
    %c0_16 = arith.constant 0 : index
    %31 = vector.load %arg2[%c1_14, %c0_15, %c0_16] : memref<6x16x16xf32, #tpu.memory_space<vmem>>, vector<1x16x16xf32>
    %32 = vector.shape_cast %31 : vector<1x16x16xf32> to vector<16x16xf32>
    %33 = vector.broadcast %22 : f32 to vector<16x2xf32>
    %34 = vector.broadcast %22 : f32 to vector<16x2xf32>
    %35 = tpu.concatenate %33, %32, %34 in 1 : vector<16x2xf32>, vector<16x16xf32>, vector<16x2xf32> -> vector<16x20xf32>
    %c1_17 = arith.constant 1 : index
    %c4_18 = arith.constant 4 : index
    %c0_19 = arith.constant 0 : index
    %36 = vector.load %arg3[%c1_17, %c4_18, %c0_19] : memref<6x24x20xf32, #tpu.memory_space<vmem>>, vector<1x16x20xf32>
    %37 = vector.shape_cast %36 : vector<1x16x20xf32> to vector<16x20xf32>
    %38 = vector.shape_cast %35 : vector<16x20xf32> to vector<1x16x20xf32>
    tpu.vector_store %arg3[%c1_17, %c4_18, %c0_19], %38 {strides = array<i32>} : memref<6x24x20xf32, #tpu.memory_space<vmem>>, vector<1x16x20xf32>,
    %c2_i32 = arith.constant 2 : i32
    %39 = arith.addi %0, %c2_i32 : i32
    %40 = arith.index_cast %39 : i32 to index
    %41 = memref.load %arg1[%40] : memref<6xf32, #tpu.memory_space<smem>>
    %42 = vector.broadcast %41 : f32 to vector<4x20xf32>
    %c2 = arith.constant 2 : index
    %c0_20 = arith.constant 0 : index
    %c0_21 = arith.constant 0 : index
    %43 = vector.load %arg3[%c2, %c0_20, %c0_21] : memref<6x24x20xf32, #tpu.memory_space<vmem>>, vector<1x4x20xf32>
    %44 = vector.shape_cast %43 : vector<1x4x20xf32> to vector<4x20xf32>
    %45 = vector.shape_cast %42 : vector<4x20xf32> to vector<1x4x20xf32>
    tpu.vector_store %arg3[%c2, %c0_20, %c0_21], %45 {strides = array<i32>} : memref<6x24x20xf32, #tpu.memory_space<vmem>>, vector<1x4x20xf32>,
    %46 = vector.broadcast %41 : f32 to vector<4x20xf32>
    %c2_22 = arith.constant 2 : index
    %c20_23 = arith.constant 20 : index
    %c0_24 = arith.constant 0 : index
    %47 = vector.load %arg3[%c2_22, %c20_23, %c0_24] : memref<6x24x20xf32, #tpu.memory_space<vmem>>, vector<1x4x20xf32>
    %48 = vector.shape_cast %47 : vector<1x4x20xf32> to vector<4x20xf32>
    %49 = vector.shape_cast %46 : vector<4x20xf32> to vector<1x4x20xf32>
    tpu.vector_store %arg3[%c2_22, %c20_23, %c0_24], %49 {strides = array<i32>} : memref<6x24x20xf32, #tpu.memory_space<vmem>>, vector<1x4x20xf32>,
    %c2_25 = arith.constant 2 : index
    %c0_26 = arith.constant 0 : index
    %c0_27 = arith.constant 0 : index
    %50 = vector.load %arg2[%c2_25, %c0_26, %c0_27] : memref<6x16x16xf32, #tpu.memory_space<vmem>>, vector<1x16x16xf32>
    %51 = vector.shape_cast %50 : vector<1x16x16xf32> to vector<16x16xf32>
    %52 = vector.broadcast %41 : f32 to vector<16x2xf32>
    %53 = vector.broadcast %41 : f32 to vector<16x2xf32>
    %54 = tpu.concatenate %52, %51, %53 in 1 : vector<16x2xf32>, vector<16x16xf32>, vector<16x2xf32> -> vector<16x20xf32>
    %c2_28 = arith.constant 2 : index
    %c4_29 = arith.constant 4 : index
    %c0_30 = arith.constant 0 : index
    %55 = vector.load %arg3[%c2_28, %c4_29, %c0_30] : memref<6x24x20xf32, #tpu.memory_space<vmem>>, vector<1x16x20xf32>
    %56 = vector.shape_cast %55 : vector<1x16x20xf32> to vector<16x20xf32>
    %57 = vector.shape_cast %54 : vector<16x20xf32> to vector<1x16x20xf32>
    tpu.vector_store %arg3[%c2_28, %c4_29, %c0_30], %57 {strides = array<i32>} : memref<6x24x20xf32, #tpu.memory_space<vmem>>, vector<1x16x20xf32>,
    %c3_i32 = arith.constant 3 : i32
    %58 = arith.addi %0, %c3_i32 : i32
    %59 = arith.index_cast %58 : i32 to index
    %60 = memref.load %arg1[%59] : memref<6xf32, #tpu.memory_space<smem>>
    %61 = vector.broadcast %60 : f32 to vector<4x20xf32>
    %c3 = arith.constant 3 : index
    %c0_31 = arith.constant 0 : index
    %c0_32 = arith.constant 0 : index
    %62 = vector.load %arg3[%c3, %c0_31, %c0_32] : memref<6x24x20xf32, #tpu.memory_space<vmem>>, vector<1x4x20xf32>
    %63 = vector.shape_cast %62 : vector<1x4x20xf32> to vector<4x20xf32>
    %64 = vector.shape_cast %61 : vector<4x20xf32> to vector<1x4x20xf32>
    tpu.vector_store %arg3[%c3, %c0_31, %c0_32], %64 {strides = array<i32>} : memref<6x24x20xf32, #tpu.memory_space<vmem>>, vector<1x4x20xf32>,
    %65 = vector.broadcast %60 : f32 to vector<4x20xf32>
    %c3_33 = arith.constant 3 : index
    %c20_34 = arith.constant 20 : index
    %c0_35 = arith.constant 0 : index
    %66 = vector.load %arg3[%c3_33, %c20_34, %c0_35] : memref<6x24x20xf32, #tpu.memory_space<vmem>>, vector<1x4x20xf32>
    %67 = vector.shape_cast %66 : vector<1x4x20xf32> to vector<4x20xf32>
    %68 = vector.shape_cast %65 : vector<4x20xf32> to vector<1x4x20xf32>
    tpu.vector_store %arg3[%c3_33, %c20_34, %c0_35], %68 {strides = array<i32>} : memref<6x24x20xf32, #tpu.memory_space<vmem>>, vector<1x4x20xf32>,
    %c3_36 = arith.constant 3 : index
    %c0_37 = arith.constant 0 : index
    %c0_38 = arith.constant 0 : index
    %69 = vector.load %arg2[%c3_36, %c0_37, %c0_38] : memref<6x16x16xf32, #tpu.memory_space<vmem>>, vector<1x16x16xf32>
    %70 = vector.shape_cast %69 : vector<1x16x16xf32> to vector<16x16xf32>
    %71 = vector.broadcast %60 : f32 to vector<16x2xf32>
    %72 = vector.broadcast %60 : f32 to vector<16x2xf32>
    %73 = tpu.concatenate %71, %70, %72 in 1 : vector<16x2xf32>, vector<16x16xf32>, vector<16x2xf32> -> vector<16x20xf32>
    %c3_39 = arith.constant 3 : index
    %c4_40 = arith.constant 4 : index
    %c0_41 = arith.constant 0 : index
    %74 = vector.load %arg3[%c3_39, %c4_40, %c0_41] : memref<6x24x20xf32, #tpu.memory_space<vmem>>, vector<1x16x20xf32>
    %75 = vector.shape_cast %74 : vector<1x16x20xf32> to vector<16x20xf32>
    %76 = vector.shape_cast %73 : vector<16x20xf32> to vector<1x16x20xf32>
    tpu.vector_store %arg3[%c3_39, %c4_40, %c0_41], %76 {strides = array<i32>} : memref<6x24x20xf32, #tpu.memory_space<vmem>>, vector<1x16x20xf32>,
    %c4_i32 = arith.constant 4 : i32
    %77 = arith.addi %0, %c4_i32 : i32
    %78 = arith.index_cast %77 : i32 to index
    %79 = memref.load %arg1[%78] : memref<6xf32, #tpu.memory_space<smem>>
    %80 = vector.broadcast %79 : f32 to vector<4x20xf32>
    %c4_42 = arith.constant 4 : index
    %c0_43 = arith.constant 0 : index
    %c0_44 = arith.constant 0 : index
    %81 = vector.load %arg3[%c4_42, %c0_43, %c0_44] : memref<6x24x20xf32, #tpu.memory_space<vmem>>, vector<1x4x20xf32>
    %82 = vector.shape_cast %81 : vector<1x4x20xf32> to vector<4x20xf32>
    %83 = vector.shape_cast %80 : vector<4x20xf32> to vector<1x4x20xf32>
    tpu.vector_store %arg3[%c4_42, %c0_43, %c0_44], %83 {strides = array<i32>} : memref<6x24x20xf32, #tpu.memory_space<vmem>>, vector<1x4x20xf32>,
    %84 = vector.broadcast %79 : f32 to vector<4x20xf32>
    %c4_45 = arith.constant 4 : index
    %c20_46 = arith.constant 20 : index
    %c0_47 = arith.constant 0 : index
    %85 = vector.load %arg3[%c4_45, %c20_46, %c0_47] : memref<6x24x20xf32, #tpu.memory_space<vmem>>, vector<1x4x20xf32>
    %86 = vector.shape_cast %85 : vector<1x4x20xf32> to vector<4x20xf32>
    %87 = vector.shape_cast %84 : vector<4x20xf32> to vector<1x4x20xf32>
    tpu.vector_store %arg3[%c4_45, %c20_46, %c0_47], %87 {strides = array<i32>} : memref<6x24x20xf32, #tpu.memory_space<vmem>>, vector<1x4x20xf32>,
    %c4_48 = arith.constant 4 : index
    %c0_49 = arith.constant 0 : index
    %c0_50 = arith.constant 0 : index
    %88 = vector.load %arg2[%c4_48, %c0_49, %c0_50] : memref<6x16x16xf32, #tpu.memory_space<vmem>>, vector<1x16x16xf32>
    %89 = vector.shape_cast %88 : vector<1x16x16xf32> to vector<16x16xf32>
    %90 = vector.broadcast %79 : f32 to vector<16x2xf32>
    %91 = vector.broadcast %79 : f32 to vector<16x2xf32>
    %92 = tpu.concatenate %90, %89, %91 in 1 : vector<16x2xf32>, vector<16x16xf32>, vector<16x2xf32> -> vector<16x20xf32>
    %c4_51 = arith.constant 4 : index
    %c4_52 = arith.constant 4 : index
    %c0_53 = arith.constant 0 : index
    %93 = vector.load %arg3[%c4_51, %c4_52, %c0_53] : memref<6x24x20xf32, #tpu.memory_space<vmem>>, vector<1x16x20xf32>
    %94 = vector.shape_cast %93 : vector<1x16x20xf32> to vector<16x20xf32>
    %95 = vector.shape_cast %92 : vector<16x20xf32> to vector<1x16x20xf32>
    tpu.vector_store %arg3[%c4_51, %c4_52, %c0_53], %95 {strides = array<i32>} : memref<6x24x20xf32, #tpu.memory_space<vmem>>, vector<1x16x20xf32>,
    %c5_i32 = arith.constant 5 : i32
    %96 = arith.addi %0, %c5_i32 : i32
    %97 = arith.index_cast %96 : i32 to index
    %98 = memref.load %arg1[%97] : memref<6xf32, #tpu.memory_space<smem>>
    %99 = vector.broadcast %98 : f32 to vector<4x20xf32>
    %c5 = arith.constant 5 : index
    %c0_54 = arith.constant 0 : index
    %c0_55 = arith.constant 0 : index
    %100 = vector.load %arg3[%c5, %c0_54, %c0_55] : memref<6x24x20xf32, #tpu.memory_space<vmem>>, vector<1x4x20xf32>
    %101 = vector.shape_cast %100 : vector<1x4x20xf32> to vector<4x20xf32>
    %102 = vector.shape_cast %99 : vector<4x20xf32> to vector<1x4x20xf32>
    tpu.vector_store %arg3[%c5, %c0_54, %c0_55], %102 {strides = array<i32>} : memref<6x24x20xf32, #tpu.memory_space<vmem>>, vector<1x4x20xf32>,
    %103 = vector.broadcast %98 : f32 to vector<4x20xf32>
    %c5_56 = arith.constant 5 : index
    %c20_57 = arith.constant 20 : index
    %c0_58 = arith.constant 0 : index
    %104 = vector.load %arg3[%c5_56, %c20_57, %c0_58] : memref<6x24x20xf32, #tpu.memory_space<vmem>>, vector<1x4x20xf32>
    %105 = vector.shape_cast %104 : vector<1x4x20xf32> to vector<4x20xf32>
    %106 = vector.shape_cast %103 : vector<4x20xf32> to vector<1x4x20xf32>
    tpu.vector_store %arg3[%c5_56, %c20_57, %c0_58], %106 {strides = array<i32>} : memref<6x24x20xf32, #tpu.memory_space<vmem>>, vector<1x4x20xf32>,
    %c5_59 = arith.constant 5 : index
    %c0_60 = arith.constant 0 : index
    %c0_61 = arith.constant 0 : index
    %107 = vector.load %arg2[%c5_59, %c0_60, %c0_61] : memref<6x16x16xf32, #tpu.memory_space<vmem>>, vector<1x16x16xf32>
    %108 = vector.shape_cast %107 : vector<1x16x16xf32> to vector<16x16xf32>
    %109 = vector.broadcast %98 : f32 to vector<16x2xf32>
    %110 = vector.broadcast %98 : f32 to vector<16x2xf32>
    %111 = tpu.concatenate %109, %108, %110 in 1 : vector<16x2xf32>, vector<16x16xf32>, vector<16x2xf32> -> vector<16x20xf32>
    %c5_62 = arith.constant 5 : index
    %c4_63 = arith.constant 4 : index
    %c0_64 = arith.constant 0 : index
    %112 = vector.load %arg3[%c5_62, %c4_63, %c0_64] : memref<6x24x20xf32, #tpu.memory_space<vmem>>, vector<1x16x20xf32>
    %113 = vector.shape_cast %112 : vector<1x16x20xf32> to vector<16x20xf32>
    %114 = vector.shape_cast %111 : vector<16x20xf32> to vector<1x16x20xf32>
    tpu.vector_store %arg3[%c5_62, %c4_63, %c0_64], %114 {strides = array<i32>} : memref<6x24x20xf32, #tpu.memory_space<vmem>>, vector<1x16x20xf32>,
    return
  }
  func.func @transform_0(%arg0: i32) -> i32 {
    %c0_i32 = arith.constant 0 : i32
    %c0_i32_0 = arith.constant 0 : i32
    return %c0_i32 : i32
  }
  func.func @transform_1(%arg0: i32) -> (i32, i32, i32) {
    %c0_i32 = arith.constant 0 : i32
    %c0_i32_0 = arith.constant 0 : i32
    %c0_i32_1 = arith.constant 0 : i32
    return %arg0, %c0_i32, %c0_i32_0 : i32, i32, i32
  }
  func.func @transform_2(%arg0: i32) -> (i32, i32, i32) {
    %c0_i32 = arith.constant 0 : i32
    %c0_i32_0 = arith.constant 0 : i32
    %c0_i32_1 = arith.constant 0 : i32
    return %arg0, %c0_i32, %c0_i32_0 : i32, i32, i32
  }
}

module attributes {stable_mosaic.version = 11 : i64} {
  func.func @_pad_plane_kernel(%arg0: i32, %arg1: memref<6xf32, #tpu.memory_space<smem>>, %arg2: memref<6x16x16xf32, #tpu.memory_space<vmem>>, %arg3: memref<6x24x20xf32, #tpu.memory_space<vmem>>) attributes {dimension_semantics = [#tpu.dimension_semantics<parallel>], iteration_bounds = array<i64: 1>, scalar_prefetch = 0 : i64, scratch_operands = 0 : i64, tpu.core_type = #tpu.core_type<tc>, window_params = [{transform_indices = @transform_0, window_bounds = array<i64: 6>}, {transform_indices = @transform_1, window_bounds = array<i64: 6, 16, 16>}, {transform_indices = @transform_2, window_bounds = array<i64: 6, 24, 20>}]} {
    %c6_i32 = arith.constant 6 : i32
    %0 = arith.muli %arg0, %c6_i32 : i32
    %c0_i32 = arith.constant 0 : i32
    %1 = arith.addi %0, %c0_i32 : i32
    %2 = arith.index_cast %1 : i32 to index
    %3 = memref.load %arg1[%2] : memref<6xf32, #tpu.memory_space<smem>>
    %4 = vector.broadcast %3 : f32 to vector<4x20xf32>
    %c0 = arith.constant 0 : index
    %c0_0 = arith.constant 0 : index
    %c0_1 = arith.constant 0 : index
    %5 = vector.load %arg3[%c0, %c0_0, %c0_1] : memref<6x24x20xf32, #tpu.memory_space<vmem>>, vector<1x4x20xf32>
    %6 = vector.shape_cast %5 : vector<1x4x20xf32> to vector<4x20xf32>
    %7 = vector.shape_cast %4 : vector<4x20xf32> to vector<1x4x20xf32>
    tpu.vector_store %arg3[%c0, %c0_0, %c0_1], %7 {strides = array<i32>} : memref<6x24x20xf32, #tpu.memory_space<vmem>>, vector<1x4x20xf32>,
    %8 = vector.broadcast %3 : f32 to vector<4x20xf32>
    %c0_2 = arith.constant 0 : index
    %c20 = arith.constant 20 : index
    %c0_3 = arith.constant 0 : index
    %9 = vector.load %arg3[%c0_2, %c20, %c0_3] : memref<6x24x20xf32, #tpu.memory_space<vmem>>, vector<1x4x20xf32>
    %10 = vector.shape_cast %9 : vector<1x4x20xf32> to vector<4x20xf32>
    %11 = vector.shape_cast %8 : vector<4x20xf32> to vector<1x4x20xf32>
    tpu.vector_store %arg3[%c0_2, %c20, %c0_3], %11 {strides = array<i32>} : memref<6x24x20xf32, #tpu.memory_space<vmem>>, vector<1x4x20xf32>,
    %c0_4 = arith.constant 0 : index
    %c0_5 = arith.constant 0 : index
    %c0_6 = arith.constant 0 : index
    %12 = vector.load %arg2[%c0_4, %c0_5, %c0_6] : memref<6x16x16xf32, #tpu.memory_space<vmem>>, vector<1x16x16xf32>
    %13 = vector.shape_cast %12 : vector<1x16x16xf32> to vector<16x16xf32>
    %14 = vector.broadcast %3 : f32 to vector<16x2xf32>
    %c0_7 = arith.constant 0 : index
    %c4 = arith.constant 4 : index
    %c0_8 = arith.constant 0 : index
    %15 = vector.load %arg3[%c0_7, %c4, %c0_8] : memref<6x24x20xf32, #tpu.memory_space<vmem>>, vector<1x16x2xf32>
    %16 = vector.shape_cast %15 : vector<1x16x2xf32> to vector<16x2xf32>
    %17 = vector.shape_cast %14 : vector<16x2xf32> to vector<1x16x2xf32>
    tpu.vector_store %arg3[%c0_7, %c4, %c0_8], %17 {strides = array<i32>} : memref<6x24x20xf32, #tpu.memory_space<vmem>>, vector<1x16x2xf32>,
    %18 = vector.broadcast %3 : f32 to vector<16x2xf32>
    %c0_9 = arith.constant 0 : index
    %c4_10 = arith.constant 4 : index
    %c18 = arith.constant 18 : index
    %19 = vector.load %arg3[%c0_9, %c4_10, %c18] : memref<6x24x20xf32, #tpu.memory_space<vmem>>, vector<1x16x2xf32>
    %20 = vector.shape_cast %19 : vector<1x16x2xf32> to vector<16x2xf32>
    %21 = vector.shape_cast %18 : vector<16x2xf32> to vector<1x16x2xf32>
    tpu.vector_store %arg3[%c0_9, %c4_10, %c18], %21 {strides = array<i32>} : memref<6x24x20xf32, #tpu.memory_space<vmem>>, vector<1x16x2xf32>,
    %c0_11 = arith.constant 0 : index
    %c4_12 = arith.constant 4 : index
    %c2 = arith.constant 2 : index
    %22 = vector.load %arg3[%c0_11, %c4_12, %c2] : memref<6x24x20xf32, #tpu.memory_space<vmem>>, vector<1x16x16xf32>
    %23 = vector.shape_cast %22 : vector<1x16x16xf32> to vector<16x16xf32>
    %24 = vector.shape_cast %13 : vector<16x16xf32> to vector<1x16x16xf32>
    tpu.vector_store %arg3[%c0_11, %c4_12, %c2], %24 {strides = array<i32>} : memref<6x24x20xf32, #tpu.memory_space<vmem>>, vector<1x16x16xf32>,
    %c1_i32 = arith.constant 1 : i32
    %25 = arith.addi %0, %c1_i32 : i32
    %26 = arith.index_cast %25 : i32 to index
    %27 = memref.load %arg1[%26] : memref<6xf32, #tpu.memory_space<smem>>
    %28 = vector.broadcast %27 : f32 to vector<4x20xf32>
    %c1 = arith.constant 1 : index
    %c0_13 = arith.constant 0 : index
    %c0_14 = arith.constant 0 : index
    %29 = vector.load %arg3[%c1, %c0_13, %c0_14] : memref<6x24x20xf32, #tpu.memory_space<vmem>>, vector<1x4x20xf32>
    %30 = vector.shape_cast %29 : vector<1x4x20xf32> to vector<4x20xf32>
    %31 = vector.shape_cast %28 : vector<4x20xf32> to vector<1x4x20xf32>
    tpu.vector_store %arg3[%c1, %c0_13, %c0_14], %31 {strides = array<i32>} : memref<6x24x20xf32, #tpu.memory_space<vmem>>, vector<1x4x20xf32>,
    %32 = vector.broadcast %27 : f32 to vector<4x20xf32>
    %c1_15 = arith.constant 1 : index
    %c20_16 = arith.constant 20 : index
    %c0_17 = arith.constant 0 : index
    %33 = vector.load %arg3[%c1_15, %c20_16, %c0_17] : memref<6x24x20xf32, #tpu.memory_space<vmem>>, vector<1x4x20xf32>
    %34 = vector.shape_cast %33 : vector<1x4x20xf32> to vector<4x20xf32>
    %35 = vector.shape_cast %32 : vector<4x20xf32> to vector<1x4x20xf32>
    tpu.vector_store %arg3[%c1_15, %c20_16, %c0_17], %35 {strides = array<i32>} : memref<6x24x20xf32, #tpu.memory_space<vmem>>, vector<1x4x20xf32>,
    %c1_18 = arith.constant 1 : index
    %c0_19 = arith.constant 0 : index
    %c0_20 = arith.constant 0 : index
    %36 = vector.load %arg2[%c1_18, %c0_19, %c0_20] : memref<6x16x16xf32, #tpu.memory_space<vmem>>, vector<1x16x16xf32>
    %37 = vector.shape_cast %36 : vector<1x16x16xf32> to vector<16x16xf32>
    %38 = vector.broadcast %27 : f32 to vector<16x2xf32>
    %c1_21 = arith.constant 1 : index
    %c4_22 = arith.constant 4 : index
    %c0_23 = arith.constant 0 : index
    %39 = vector.load %arg3[%c1_21, %c4_22, %c0_23] : memref<6x24x20xf32, #tpu.memory_space<vmem>>, vector<1x16x2xf32>
    %40 = vector.shape_cast %39 : vector<1x16x2xf32> to vector<16x2xf32>
    %41 = vector.shape_cast %38 : vector<16x2xf32> to vector<1x16x2xf32>
    tpu.vector_store %arg3[%c1_21, %c4_22, %c0_23], %41 {strides = array<i32>} : memref<6x24x20xf32, #tpu.memory_space<vmem>>, vector<1x16x2xf32>,
    %42 = vector.broadcast %27 : f32 to vector<16x2xf32>
    %c1_24 = arith.constant 1 : index
    %c4_25 = arith.constant 4 : index
    %c18_26 = arith.constant 18 : index
    %43 = vector.load %arg3[%c1_24, %c4_25, %c18_26] : memref<6x24x20xf32, #tpu.memory_space<vmem>>, vector<1x16x2xf32>
    %44 = vector.shape_cast %43 : vector<1x16x2xf32> to vector<16x2xf32>
    %45 = vector.shape_cast %42 : vector<16x2xf32> to vector<1x16x2xf32>
    tpu.vector_store %arg3[%c1_24, %c4_25, %c18_26], %45 {strides = array<i32>} : memref<6x24x20xf32, #tpu.memory_space<vmem>>, vector<1x16x2xf32>,
    %c1_27 = arith.constant 1 : index
    %c4_28 = arith.constant 4 : index
    %c2_29 = arith.constant 2 : index
    %46 = vector.load %arg3[%c1_27, %c4_28, %c2_29] : memref<6x24x20xf32, #tpu.memory_space<vmem>>, vector<1x16x16xf32>
    %47 = vector.shape_cast %46 : vector<1x16x16xf32> to vector<16x16xf32>
    %48 = vector.shape_cast %37 : vector<16x16xf32> to vector<1x16x16xf32>
    tpu.vector_store %arg3[%c1_27, %c4_28, %c2_29], %48 {strides = array<i32>} : memref<6x24x20xf32, #tpu.memory_space<vmem>>, vector<1x16x16xf32>,
    %c2_i32 = arith.constant 2 : i32
    %49 = arith.addi %0, %c2_i32 : i32
    %50 = arith.index_cast %49 : i32 to index
    %51 = memref.load %arg1[%50] : memref<6xf32, #tpu.memory_space<smem>>
    %52 = vector.broadcast %51 : f32 to vector<4x20xf32>
    %c2_30 = arith.constant 2 : index
    %c0_31 = arith.constant 0 : index
    %c0_32 = arith.constant 0 : index
    %53 = vector.load %arg3[%c2_30, %c0_31, %c0_32] : memref<6x24x20xf32, #tpu.memory_space<vmem>>, vector<1x4x20xf32>
    %54 = vector.shape_cast %53 : vector<1x4x20xf32> to vector<4x20xf32>
    %55 = vector.shape_cast %52 : vector<4x20xf32> to vector<1x4x20xf32>
    tpu.vector_store %arg3[%c2_30, %c0_31, %c0_32], %55 {strides = array<i32>} : memref<6x24x20xf32, #tpu.memory_space<vmem>>, vector<1x4x20xf32>,
    %56 = vector.broadcast %51 : f32 to vector<4x20xf32>
    %c2_33 = arith.constant 2 : index
    %c20_34 = arith.constant 20 : index
    %c0_35 = arith.constant 0 : index
    %57 = vector.load %arg3[%c2_33, %c20_34, %c0_35] : memref<6x24x20xf32, #tpu.memory_space<vmem>>, vector<1x4x20xf32>
    %58 = vector.shape_cast %57 : vector<1x4x20xf32> to vector<4x20xf32>
    %59 = vector.shape_cast %56 : vector<4x20xf32> to vector<1x4x20xf32>
    tpu.vector_store %arg3[%c2_33, %c20_34, %c0_35], %59 {strides = array<i32>} : memref<6x24x20xf32, #tpu.memory_space<vmem>>, vector<1x4x20xf32>,
    %c2_36 = arith.constant 2 : index
    %c0_37 = arith.constant 0 : index
    %c0_38 = arith.constant 0 : index
    %60 = vector.load %arg2[%c2_36, %c0_37, %c0_38] : memref<6x16x16xf32, #tpu.memory_space<vmem>>, vector<1x16x16xf32>
    %61 = vector.shape_cast %60 : vector<1x16x16xf32> to vector<16x16xf32>
    %62 = vector.broadcast %51 : f32 to vector<16x2xf32>
    %c2_39 = arith.constant 2 : index
    %c4_40 = arith.constant 4 : index
    %c0_41 = arith.constant 0 : index
    %63 = vector.load %arg3[%c2_39, %c4_40, %c0_41] : memref<6x24x20xf32, #tpu.memory_space<vmem>>, vector<1x16x2xf32>
    %64 = vector.shape_cast %63 : vector<1x16x2xf32> to vector<16x2xf32>
    %65 = vector.shape_cast %62 : vector<16x2xf32> to vector<1x16x2xf32>
    tpu.vector_store %arg3[%c2_39, %c4_40, %c0_41], %65 {strides = array<i32>} : memref<6x24x20xf32, #tpu.memory_space<vmem>>, vector<1x16x2xf32>,
    %66 = vector.broadcast %51 : f32 to vector<16x2xf32>
    %c2_42 = arith.constant 2 : index
    %c4_43 = arith.constant 4 : index
    %c18_44 = arith.constant 18 : index
    %67 = vector.load %arg3[%c2_42, %c4_43, %c18_44] : memref<6x24x20xf32, #tpu.memory_space<vmem>>, vector<1x16x2xf32>
    %68 = vector.shape_cast %67 : vector<1x16x2xf32> to vector<16x2xf32>
    %69 = vector.shape_cast %66 : vector<16x2xf32> to vector<1x16x2xf32>
    tpu.vector_store %arg3[%c2_42, %c4_43, %c18_44], %69 {strides = array<i32>} : memref<6x24x20xf32, #tpu.memory_space<vmem>>, vector<1x16x2xf32>,
    %c2_45 = arith.constant 2 : index
    %c4_46 = arith.constant 4 : index
    %c2_47 = arith.constant 2 : index
    %70 = vector.load %arg3[%c2_45, %c4_46, %c2_47] : memref<6x24x20xf32, #tpu.memory_space<vmem>>, vector<1x16x16xf32>
    %71 = vector.shape_cast %70 : vector<1x16x16xf32> to vector<16x16xf32>
    %72 = vector.shape_cast %61 : vector<16x16xf32> to vector<1x16x16xf32>
    tpu.vector_store %arg3[%c2_45, %c4_46, %c2_47], %72 {strides = array<i32>} : memref<6x24x20xf32, #tpu.memory_space<vmem>>, vector<1x16x16xf32>,
    %c3_i32 = arith.constant 3 : i32
    %73 = arith.addi %0, %c3_i32 : i32
    %74 = arith.index_cast %73 : i32 to index
    %75 = memref.load %arg1[%74] : memref<6xf32, #tpu.memory_space<smem>>
    %76 = vector.broadcast %75 : f32 to vector<4x20xf32>
    %c3 = arith.constant 3 : index
    %c0_48 = arith.constant 0 : index
    %c0_49 = arith.constant 0 : index
    %77 = vector.load %arg3[%c3, %c0_48, %c0_49] : memref<6x24x20xf32, #tpu.memory_space<vmem>>, vector<1x4x20xf32>
    %78 = vector.shape_cast %77 : vector<1x4x20xf32> to vector<4x20xf32>
    %79 = vector.shape_cast %76 : vector<4x20xf32> to vector<1x4x20xf32>
    tpu.vector_store %arg3[%c3, %c0_48, %c0_49], %79 {strides = array<i32>} : memref<6x24x20xf32, #tpu.memory_space<vmem>>, vector<1x4x20xf32>,
    %80 = vector.broadcast %75 : f32 to vector<4x20xf32>
    %c3_50 = arith.constant 3 : index
    %c20_51 = arith.constant 20 : index
    %c0_52 = arith.constant 0 : index
    %81 = vector.load %arg3[%c3_50, %c20_51, %c0_52] : memref<6x24x20xf32, #tpu.memory_space<vmem>>, vector<1x4x20xf32>
    %82 = vector.shape_cast %81 : vector<1x4x20xf32> to vector<4x20xf32>
    %83 = vector.shape_cast %80 : vector<4x20xf32> to vector<1x4x20xf32>
    tpu.vector_store %arg3[%c3_50, %c20_51, %c0_52], %83 {strides = array<i32>} : memref<6x24x20xf32, #tpu.memory_space<vmem>>, vector<1x4x20xf32>,
    %c3_53 = arith.constant 3 : index
    %c0_54 = arith.constant 0 : index
    %c0_55 = arith.constant 0 : index
    %84 = vector.load %arg2[%c3_53, %c0_54, %c0_55] : memref<6x16x16xf32, #tpu.memory_space<vmem>>, vector<1x16x16xf32>
    %85 = vector.shape_cast %84 : vector<1x16x16xf32> to vector<16x16xf32>
    %86 = vector.broadcast %75 : f32 to vector<16x2xf32>
    %c3_56 = arith.constant 3 : index
    %c4_57 = arith.constant 4 : index
    %c0_58 = arith.constant 0 : index
    %87 = vector.load %arg3[%c3_56, %c4_57, %c0_58] : memref<6x24x20xf32, #tpu.memory_space<vmem>>, vector<1x16x2xf32>
    %88 = vector.shape_cast %87 : vector<1x16x2xf32> to vector<16x2xf32>
    %89 = vector.shape_cast %86 : vector<16x2xf32> to vector<1x16x2xf32>
    tpu.vector_store %arg3[%c3_56, %c4_57, %c0_58], %89 {strides = array<i32>} : memref<6x24x20xf32, #tpu.memory_space<vmem>>, vector<1x16x2xf32>,
    %90 = vector.broadcast %75 : f32 to vector<16x2xf32>
    %c3_59 = arith.constant 3 : index
    %c4_60 = arith.constant 4 : index
    %c18_61 = arith.constant 18 : index
    %91 = vector.load %arg3[%c3_59, %c4_60, %c18_61] : memref<6x24x20xf32, #tpu.memory_space<vmem>>, vector<1x16x2xf32>
    %92 = vector.shape_cast %91 : vector<1x16x2xf32> to vector<16x2xf32>
    %93 = vector.shape_cast %90 : vector<16x2xf32> to vector<1x16x2xf32>
    tpu.vector_store %arg3[%c3_59, %c4_60, %c18_61], %93 {strides = array<i32>} : memref<6x24x20xf32, #tpu.memory_space<vmem>>, vector<1x16x2xf32>,
    %c3_62 = arith.constant 3 : index
    %c4_63 = arith.constant 4 : index
    %c2_64 = arith.constant 2 : index
    %94 = vector.load %arg3[%c3_62, %c4_63, %c2_64] : memref<6x24x20xf32, #tpu.memory_space<vmem>>, vector<1x16x16xf32>
    %95 = vector.shape_cast %94 : vector<1x16x16xf32> to vector<16x16xf32>
    %96 = vector.shape_cast %85 : vector<16x16xf32> to vector<1x16x16xf32>
    tpu.vector_store %arg3[%c3_62, %c4_63, %c2_64], %96 {strides = array<i32>} : memref<6x24x20xf32, #tpu.memory_space<vmem>>, vector<1x16x16xf32>,
    %c4_i32 = arith.constant 4 : i32
    %97 = arith.addi %0, %c4_i32 : i32
    %98 = arith.index_cast %97 : i32 to index
    %99 = memref.load %arg1[%98] : memref<6xf32, #tpu.memory_space<smem>>
    %100 = vector.broadcast %99 : f32 to vector<4x20xf32>
    %c4_65 = arith.constant 4 : index
    %c0_66 = arith.constant 0 : index
    %c0_67 = arith.constant 0 : index
    %101 = vector.load %arg3[%c4_65, %c0_66, %c0_67] : memref<6x24x20xf32, #tpu.memory_space<vmem>>, vector<1x4x20xf32>
    %102 = vector.shape_cast %101 : vector<1x4x20xf32> to vector<4x20xf32>
    %103 = vector.shape_cast %100 : vector<4x20xf32> to vector<1x4x20xf32>
    tpu.vector_store %arg3[%c4_65, %c0_66, %c0_67], %103 {strides = array<i32>} : memref<6x24x20xf32, #tpu.memory_space<vmem>>, vector<1x4x20xf32>,
    %104 = vector.broadcast %99 : f32 to vector<4x20xf32>
    %c4_68 = arith.constant 4 : index
    %c20_69 = arith.constant 20 : index
    %c0_70 = arith.constant 0 : index
    %105 = vector.load %arg3[%c4_68, %c20_69, %c0_70] : memref<6x24x20xf32, #tpu.memory_space<vmem>>, vector<1x4x20xf32>
    %106 = vector.shape_cast %105 : vector<1x4x20xf32> to vector<4x20xf32>
    %107 = vector.shape_cast %104 : vector<4x20xf32> to vector<1x4x20xf32>
    tpu.vector_store %arg3[%c4_68, %c20_69, %c0_70], %107 {strides = array<i32>} : memref<6x24x20xf32, #tpu.memory_space<vmem>>, vector<1x4x20xf32>,
    %c4_71 = arith.constant 4 : index
    %c0_72 = arith.constant 0 : index
    %c0_73 = arith.constant 0 : index
    %108 = vector.load %arg2[%c4_71, %c0_72, %c0_73] : memref<6x16x16xf32, #tpu.memory_space<vmem>>, vector<1x16x16xf32>
    %109 = vector.shape_cast %108 : vector<1x16x16xf32> to vector<16x16xf32>
    %110 = vector.broadcast %99 : f32 to vector<16x2xf32>
    %c4_74 = arith.constant 4 : index
    %c4_75 = arith.constant 4 : index
    %c0_76 = arith.constant 0 : index
    %111 = vector.load %arg3[%c4_74, %c4_75, %c0_76] : memref<6x24x20xf32, #tpu.memory_space<vmem>>, vector<1x16x2xf32>
    %112 = vector.shape_cast %111 : vector<1x16x2xf32> to vector<16x2xf32>
    %113 = vector.shape_cast %110 : vector<16x2xf32> to vector<1x16x2xf32>
    tpu.vector_store %arg3[%c4_74, %c4_75, %c0_76], %113 {strides = array<i32>} : memref<6x24x20xf32, #tpu.memory_space<vmem>>, vector<1x16x2xf32>,
    %114 = vector.broadcast %99 : f32 to vector<16x2xf32>
    %c4_77 = arith.constant 4 : index
    %c4_78 = arith.constant 4 : index
    %c18_79 = arith.constant 18 : index
    %115 = vector.load %arg3[%c4_77, %c4_78, %c18_79] : memref<6x24x20xf32, #tpu.memory_space<vmem>>, vector<1x16x2xf32>
    %116 = vector.shape_cast %115 : vector<1x16x2xf32> to vector<16x2xf32>
    %117 = vector.shape_cast %114 : vector<16x2xf32> to vector<1x16x2xf32>
    tpu.vector_store %arg3[%c4_77, %c4_78, %c18_79], %117 {strides = array<i32>} : memref<6x24x20xf32, #tpu.memory_space<vmem>>, vector<1x16x2xf32>,
    %c4_80 = arith.constant 4 : index
    %c4_81 = arith.constant 4 : index
    %c2_82 = arith.constant 2 : index
    %118 = vector.load %arg3[%c4_80, %c4_81, %c2_82] : memref<6x24x20xf32, #tpu.memory_space<vmem>>, vector<1x16x16xf32>
    %119 = vector.shape_cast %118 : vector<1x16x16xf32> to vector<16x16xf32>
    %120 = vector.shape_cast %109 : vector<16x16xf32> to vector<1x16x16xf32>
    tpu.vector_store %arg3[%c4_80, %c4_81, %c2_82], %120 {strides = array<i32>} : memref<6x24x20xf32, #tpu.memory_space<vmem>>, vector<1x16x16xf32>,
    %c5_i32 = arith.constant 5 : i32
    %121 = arith.addi %0, %c5_i32 : i32
    %122 = arith.index_cast %121 : i32 to index
    %123 = memref.load %arg1[%122] : memref<6xf32, #tpu.memory_space<smem>>
    %124 = vector.broadcast %123 : f32 to vector<4x20xf32>
    %c5 = arith.constant 5 : index
    %c0_83 = arith.constant 0 : index
    %c0_84 = arith.constant 0 : index
    %125 = vector.load %arg3[%c5, %c0_83, %c0_84] : memref<6x24x20xf32, #tpu.memory_space<vmem>>, vector<1x4x20xf32>
    %126 = vector.shape_cast %125 : vector<1x4x20xf32> to vector<4x20xf32>
    %127 = vector.shape_cast %124 : vector<4x20xf32> to vector<1x4x20xf32>
    tpu.vector_store %arg3[%c5, %c0_83, %c0_84], %127 {strides = array<i32>} : memref<6x24x20xf32, #tpu.memory_space<vmem>>, vector<1x4x20xf32>,
    %128 = vector.broadcast %123 : f32 to vector<4x20xf32>
    %c5_85 = arith.constant 5 : index
    %c20_86 = arith.constant 20 : index
    %c0_87 = arith.constant 0 : index
    %129 = vector.load %arg3[%c5_85, %c20_86, %c0_87] : memref<6x24x20xf32, #tpu.memory_space<vmem>>, vector<1x4x20xf32>
    %130 = vector.shape_cast %129 : vector<1x4x20xf32> to vector<4x20xf32>
    %131 = vector.shape_cast %128 : vector<4x20xf32> to vector<1x4x20xf32>
    tpu.vector_store %arg3[%c5_85, %c20_86, %c0_87], %131 {strides = array<i32>} : memref<6x24x20xf32, #tpu.memory_space<vmem>>, vector<1x4x20xf32>,
    %c5_88 = arith.constant 5 : index
    %c0_89 = arith.constant 0 : index
    %c0_90 = arith.constant 0 : index
    %132 = vector.load %arg2[%c5_88, %c0_89, %c0_90] : memref<6x16x16xf32, #tpu.memory_space<vmem>>, vector<1x16x16xf32>
    %133 = vector.shape_cast %132 : vector<1x16x16xf32> to vector<16x16xf32>
    %134 = vector.broadcast %123 : f32 to vector<16x2xf32>
    %c5_91 = arith.constant 5 : index
    %c4_92 = arith.constant 4 : index
    %c0_93 = arith.constant 0 : index
    %135 = vector.load %arg3[%c5_91, %c4_92, %c0_93] : memref<6x24x20xf32, #tpu.memory_space<vmem>>, vector<1x16x2xf32>
    %136 = vector.shape_cast %135 : vector<1x16x2xf32> to vector<16x2xf32>
    %137 = vector.shape_cast %134 : vector<16x2xf32> to vector<1x16x2xf32>
    tpu.vector_store %arg3[%c5_91, %c4_92, %c0_93], %137 {strides = array<i32>} : memref<6x24x20xf32, #tpu.memory_space<vmem>>, vector<1x16x2xf32>,
    %138 = vector.broadcast %123 : f32 to vector<16x2xf32>
    %c5_94 = arith.constant 5 : index
    %c4_95 = arith.constant 4 : index
    %c18_96 = arith.constant 18 : index
    %139 = vector.load %arg3[%c5_94, %c4_95, %c18_96] : memref<6x24x20xf32, #tpu.memory_space<vmem>>, vector<1x16x2xf32>
    %140 = vector.shape_cast %139 : vector<1x16x2xf32> to vector<16x2xf32>
    %141 = vector.shape_cast %138 : vector<16x2xf32> to vector<1x16x2xf32>
    tpu.vector_store %arg3[%c5_94, %c4_95, %c18_96], %141 {strides = array<i32>} : memref<6x24x20xf32, #tpu.memory_space<vmem>>, vector<1x16x2xf32>,
    %c5_97 = arith.constant 5 : index
    %c4_98 = arith.constant 4 : index
    %c2_99 = arith.constant 2 : index
    %142 = vector.load %arg3[%c5_97, %c4_98, %c2_99] : memref<6x24x20xf32, #tpu.memory_space<vmem>>, vector<1x16x16xf32>
    %143 = vector.shape_cast %142 : vector<1x16x16xf32> to vector<16x16xf32>
    %144 = vector.shape_cast %133 : vector<16x16xf32> to vector<1x16x16xf32>
    tpu.vector_store %arg3[%c5_97, %c4_98, %c2_99], %144 {strides = array<i32>} : memref<6x24x20xf32, #tpu.memory_space<vmem>>, vector<1x16x16xf32>,
    return
  }
  func.func @transform_0(%arg0: i32) -> i32 {
    %c0_i32 = arith.constant 0 : i32
    %c0_i32_0 = arith.constant 0 : i32
    return %c0_i32 : i32
  }
  func.func @transform_1(%arg0: i32) -> (i32, i32, i32) {
    %c0_i32 = arith.constant 0 : i32
    %c0_i32_0 = arith.constant 0 : i32
    %c0_i32_1 = arith.constant 0 : i32
    return %arg0, %c0_i32, %c0_i32_0 : i32, i32, i32
  }
  func.func @transform_2(%arg0: i32) -> (i32, i32, i32) {
    %c0_i32 = arith.constant 0 : i32
    %c0_i32_0 = arith.constant 0 : i32
    %c0_i32_1 = arith.constant 0 : i32
    return %arg0, %c0_i32, %c0_i32_0 : i32, i32, i32
  }
}

</mosaic_0001>

<llo_original>
// kernel: tpu_custom_call.1
$region0: #{tpu_custom_call.1}
  #allocation0 [shape = 'u32[]', space=smem, size = 0x4, offset = 0x4, fixed_abs, tag = 'smem constant byte address 0x4 - core index']
  #allocation1 [shape = 'u32[144,128]{1,0:T(1,128)}', space=vmem, size = 0x12000, scoped, tag = 'internal scratch']
  %s0 = inlined_call_operand.hbm [shape: f32[6], index: 0, kind: input, shape index: {}]
  %s1 = inlined_call_operand.hbm [shape: f32[6,16,16], index: 1, kind: input, shape index: {}]
  %s2 = inlined_call_operand.hbm [shape: f32[6,24,20], index: 2, kind: output, shape index: {}]
  %s3 = sld [smem:[#allocation0]]
  $region26: #{tpu_custom_call.1} parent=0
    _
  %s5 = ssub.s32 1, %s3
  %s6 = scalar_select 0, %s5, %s3
  $region1: #{tpu_custom_call.1} parent=0
    #allocation2 [shape = 'u8[512]{0}', space=smem, size = 0x200, scoped, tag = 'input window, operand 0, single buffered']
    #allocation3 [shape = 's32[1]{0}', space=sflag, size = 0x4, scoped, tag = 'scoped memory for tpu_custom_call.1']
    #allocation4 [shape = 's32[1]{0}', space=sflag, size = 0x4, scoped, tag = 'scoped memory for tpu_custom_call.1']
    #allocation5 [shape = 's32[1]{0}', space=sflag, size = 0x4, scoped, tag = 'scoped memory for tpu_custom_call.1']
    #allocation6 [shape = 'u8[49152]{0}', space=vmem, size = 0xc000, scoped, tag = 'input window, operand 1, single buffered']
    #allocation7 [shape = 'u8[73728]{0}', space=vmem, size = 0x12000, scoped, tag = 'output window, operand 0, single buffered']
    %7 = vsyncpa [#allocation5], 0
    %8 = vsyncpa [#allocation3], 0
    %9 = vsyncpa [#allocation4], 0
    // Predicated region
    $region2: #{tpu_custom_call.1} parent=1 // pred_check
      _
    $region3: #{tpu_custom_call.1} parent=1 // pred_check_branch
      %11 = sbr.rel (0) target = $region5
    $region4: #{tpu_custom_call.1} parent=1 // pred_region
      %s13 = ssub.s32 16, 16
      %14 = vsyncadd [#allocation5], %s13
      %17 = dma.hbm_to_smem %s0, 16, [#allocation2], [#allocation5]
    $region5: #{tpu_custom_call.1} parent=1 // pred_fallthru
      _
    // Predicated region
    $region6: #{tpu_custom_call.1} parent=1 // pred_check
      _
    $region7: #{tpu_custom_call.1} parent=1 // pred_check_branch
      %19 = sbr.rel (0) target = $region9
    $region8: #{tpu_custom_call.1} parent=1 // pred_region
      %s21 = ssub.s32 1536, 1536
      %22 = vsyncadd [#allocation3], %s21
      %s23 = sshll.u32 [#allocation6], 4
      %s24 = int_to_ptr.vmem [resolvable:$true] %s23
      %29 = dma.hbm_to_vmem [thread:$0]  %s1, 1536, %s24, [#allocation3], 128, 128, 8
    $region9: #{tpu_custom_call.1} parent=1 // pred_fallthru
      _
    // Predicated region
    $region10: #{tpu_custom_call.1} parent=1 // pred_check
      _
    $region11: #{tpu_custom_call.1} parent=1 // pred_check_branch
      %31 = sbr.rel (0) target = $region13
    $region12: #{tpu_custom_call.1} parent=1 // pred_region
      %32 = dma.done [#allocation5], 16
    $region13: #{tpu_custom_call.1} parent=1 // pred_fallthru
      _
    // Predicated region
    $region14: #{tpu_custom_call.1} parent=1 // pred_check
      _
    $region15: #{tpu_custom_call.1} parent=1 // pred_check_branch
      %34 = sbr.rel (0) target = $region17
    $region16: #{tpu_custom_call.1} parent=1 // pred_region
      %35 = dma.done [#allocation3], 1536
    $region17: #{tpu_custom_call.1} parent=1 // pred_fallthru
      _
    %36 = sfence
    %s37 = smul.u32 0, 6
    %s38 = sld [smem:[#allocation2 + %s37]]
    %v39 = vstv %s38
    %vm40 = vcmask 158720
    %41 = vst.msk [vmem:[#allocation7] sm:$0xf] %vm40, %v39
    %42 = vst.msk [vmem:[#allocation7 + $0x14] sm:$0xf] %vm40, %v39
    %v43 = vld [vmem:[#allocation6] sm:$0xff]
    %v44 = vld [vmem:[#allocation6 + $0x8] sm:$0xff]
    %47 = vrot.lane.b32.xlu0 %v43, 2
    %v48 = vpop.permute.xlu0 %47
    %49 = vrot.lane.b32.xlu0 %v44, 2
    %v50 = vpop.permute.xlu0 %49
    %vm53 = vcmask 15360
    %v54 = vsel %vm53, %v39, %v48
    %v55 = vsel %vm53, %v39, %v50
    %vm56 = vcmask 146432
    %v57 = vsel %vm56, %v54, %v39
    %v58 = vsel %vm56, %v55, %v39
    %vm59 = vcmask 162816
    %60 = vst.msk [vmem:[#allocation7 + $0x4] sm:$0xff] %vm59, %v57
    %61 = vst.msk [vmem:[#allocation7 + $0xc] sm:$0xff] %vm59, %v58
    %s62 = sadd.s32 %s37, 1
    %s63 = sld [smem:[#allocation2 + %s62]]
    %v64 = vstv %s63
    %s65 = scalar_lea.vmem [#allocation7], 24
    %66 = vst.msk [vmem:[%s65] sm:$0xf] %vm40, %v64
    %67 = vst.msk [vmem:[%s65 + $0x14] sm:$0xf] %vm40, %v64
    %s68 = scalar_lea.vmem [#allocation6], 16
    %v69 = vld [vmem:[%s68] sm:$0xff]
    %v70 = vld [vmem:[%s68 + $0x8] sm:$0xff]
    %73 = vrot.lane.b32.xlu0 %v69, 2
    %v74 = vpop.permute.xlu0 %73
    %75 = vrot.lane.b32.xlu0 %v70, 2
    %v76 = vpop.permute.xlu0 %75
    %v79 = vsel %vm53, %v64, %v74
    %v80 = vsel %vm53, %v64, %v76
    %v81 = vsel %vm56, %v79, %v64
    %v82 = vsel %vm56, %v80, %v64
    %83 = vst.msk [vmem:[%s65 + $0x4] sm:$0xff] %vm59, %v81
    %84 = vst.msk [vmem:[%s65 + $0xc] sm:$0xff] %vm59, %v82
    %s85 = sadd.s32 %s37, 2
    %s86 = sld [smem:[#allocation2 + %s85]]
    %v87 = vstv %s86
    %s88 = scalar_lea.vmem [#allocation7], 48
    %89 = vst.msk [vmem:[%s88] sm:$0xf] %vm40, %v87
    %90 = vst.msk [vmem:[%s88 + $0x14] sm:$0xf] %vm40, %v87
    %s91 = scalar_lea.vmem [#allocation6], 32
    %v92 = vld [vmem:[%s91] sm:$0xff]
    %v93 = vld [vmem:[%s91 + $0x8] sm:$0xff]
    %96 = vrot.lane.b32.xlu0 %v92, 2
    %v97 = vpop.permute.xlu0 %96
    %98 = vrot.lane.b32.xlu0 %v93, 2
    %v99 = vpop.permute.xlu0 %98
    %v102 = vsel %vm53, %v87, %v97
    %v103 = vsel %vm53, %v87, %v99
    %v104 = vsel %vm56, %v102, %v87
    %v105 = vsel %vm56, %v103, %v87
    %106 = vst.msk [vmem:[%s88 + $0x4] sm:$0xff] %vm59, %v104
    %107 = vst.msk [vmem:[%s88 + $0xc] sm:$0xff] %vm59, %v105
    %s108 = sadd.s32 %s37, 3
    %s109 = sld [smem:[#allocation2 + %s108]]
    %v110 = vstv %s109
    %s111 = scalar_lea.vmem [#allocation7], 72
    %112 = vst.msk [vmem:[%s111] sm:$0xf] %vm40, %v110
    %113 = vst.msk [vmem:[%s111 + $0x14] sm:$0xf] %vm40, %v110
    %s114 = scalar_lea.vmem [#allocation6], 48
    %v115 = vld [vmem:[%s114] sm:$0xff]
    %v116 = vld [vmem:[%s114 + $0x8] sm:$0xff]
    %119 = vrot.lane.b32.xlu0 %v115, 2
    %v120 = vpop.permute.xlu0 %119
    %121 = vrot.lane.b32.xlu0 %v116, 2
    %v122 = vpop.permute.xlu0 %121
    %v125 = vsel %vm53, %v110, %v120
    %v126 = vsel %vm53, %v110, %v122
    %v127 = vsel %vm56, %v125, %v110
    %v128 = vsel %vm56, %v126, %v110
    %129 = vst.msk [vmem:[%s111 + $0x4] sm:$0xff] %vm59, %v127
    %130 = vst.msk [vmem:[%s111 + $0xc] sm:$0xff] %vm59, %v128
    %s131 = sadd.s32 %s37, 4
    %s132 = sld [smem:[#allocation2 + %s131]]
    %v133 = vstv %s132
    %s134 = scalar_lea.vmem [#allocation7], 96
    %135 = vst.msk [vmem:[%s134] sm:$0xf] %vm40, %v133
    %136 = vst.msk [vmem:[%s134 + $0x14] sm:$0xf] %vm40, %v133
    %s137 = scalar_lea.vmem [#allocation6], 64
    %v138 = vld [vmem:[%s137] sm:$0xff]
    %v139 = vld [vmem:[%s137 + $0x8] sm:$0xff]
    %142 = vrot.lane.b32.xlu0 %v138, 2
    %v143 = vpop.permute.xlu0 %142
    %144 = vrot.lane.b32.xlu0 %v139, 2
    %v145 = vpop.permute.xlu0 %144
    %v148 = vsel %vm53, %v133, %v143
    %v149 = vsel %vm53, %v133, %v145
    %v150 = vsel %vm56, %v148, %v133
    %v151 = vsel %vm56, %v149, %v133
    %152 = vst.msk [vmem:[%s134 + $0x4] sm:$0xff] %vm59, %v150
    %153 = vst.msk [vmem:[%s134 + $0xc] sm:$0xff] %vm59, %v151
    %s154 = sadd.s32 %s37, 5
    %s155 = sld [smem:[#allocation2 + %s154]]
    %v156 = vstv %s155
    %s157 = scalar_lea.vmem [#allocation7], 120
    %158 = vst.msk [vmem:[%s157] sm:$0xf] %vm40, %v156
    %159 = vst.msk [vmem:[%s157 + $0x14] sm:$0xf] %vm40, %v156
    %s160 = scalar_lea.vmem [#allocation6], 80
    %v161 = vld [vmem:[%s160] sm:$0xff]
    %v162 = vld [vmem:[%s160 + $0x8] sm:$0xff]
    %165 = vrot.lane.b32.xlu0 %v161, 2
    %v166 = vpop.permute.xlu0 %165
    %167 = vrot.lane.b32.xlu0 %v162, 2
    %v168 = vpop.permute.xlu0 %167
    %v171 = vsel %vm53, %v156, %v166
    %v172 = vsel %vm53, %v156, %v168
    %v173 = vsel %vm56, %v171, %v156
    %v174 = vsel %vm56, %v172, %v156
    %175 = vst.msk [vmem:[%s157 + $0x4] sm:$0xff] %vm59, %v173
    %176 = vst.msk [vmem:[%s157 + $0xc] sm:$0xff] %vm59, %v174
    // Predicated region
    $region18: #{tpu_custom_call.1} parent=1 // pred_check
      _
    $region19: #{tpu_custom_call.1} parent=1 // pred_check_branch
      %178 = sbr.rel (0) target = $region21
    $region20: #{tpu_custom_call.1} parent=1 // pred_region
      %s180 = ssub.s32 2304, 2304
      %181 = vsyncadd [#allocation4], %s180
      %s182 = sshll.u32 [#allocation7], 4
      %s183 = int_to_ptr.vmem [resolvable:$true] %s182
      %188 = dma.vmem_to_hbm [thread:$0]  %s183, 2304, %s2, [#allocation4], 128, 128, 8
    $region21: #{tpu_custom_call.1} parent=1 // pred_fallthru
      _
    // Predicated region
    $region22: #{tpu_custom_call.1} parent=1 // pred_check
      _
    $region23: #{tpu_custom_call.1} parent=1 // pred_check_branch
      %190 = sbr.rel (0) target = $region25
    $region24: #{tpu_custom_call.1} parent=1 // pred_region
      %191 = dma.done [#allocation4], 2304
    $region25: #{tpu_custom_call.1} parent=1 // pred_fallthru
      _
    %192 = vsyncpa [#allocation3], 1
    %193 = vsyncpa [#allocation4], 1
    %194 = vsyncpa [#allocation5], 1

// kernel: tpu_custom_call.1
$region0: #{tpu_custom_call.1}
  #allocation0 [shape = 'u32[]', space=smem, size = 0x4, offset = 0x4, fixed_abs, tag = 'smem constant byte address 0x4 - core index']
  #allocation1 [shape = 'u32[144,128]{1,0:T(1,128)}', space=vmem, size = 0x12000, scoped, tag = 'internal scratch']
  %s0 = inlined_call_operand.hbm [shape: f32[6], index: 0, kind: input, shape index: {}]
  %s1 = inlined_call_operand.hbm [shape: f32[6,16,16], index: 1, kind: input, shape index: {}]
  %s2 = inlined_call_operand.hbm [shape: f32[6,24,20], index: 2, kind: output, shape index: {}]
  %s3 = sld [smem:[#allocation0]]
  $region26: #{tpu_custom_call.1} parent=0
    _
  %s5 = ssub.s32 1, %s3
  %s6 = scalar_select 0, %s5, %s3
  $region1: #{tpu_custom_call.1} parent=0
    #allocation2 [shape = 'u8[512]{0}', space=smem, size = 0x200, scoped, tag = 'input window, operand 0, single buffered']
    #allocation3 [shape = 's32[1]{0}', space=sflag, size = 0x4, scoped, tag = 'scoped memory for tpu_custom_call.1']
    #allocation4 [shape = 's32[1]{0}', space=sflag, size = 0x4, scoped, tag = 'scoped memory for tpu_custom_call.1']
    #allocation5 [shape = 's32[1]{0}', space=sflag, size = 0x4, scoped, tag = 'scoped memory for tpu_custom_call.1']
    #allocation6 [shape = 'u8[49152]{0}', space=vmem, size = 0xc000, scoped, tag = 'input window, operand 1, single buffered']
    #allocation7 [shape = 'u8[73728]{0}', space=vmem, size = 0x12000, scoped, tag = 'output window, operand 0, single buffered']
    %7 = vsyncpa [#allocation5], 0
    %8 = vsyncpa [#allocation3], 0
    %9 = vsyncpa [#allocation4], 0
    // Predicated region
    $region2: #{tpu_custom_call.1} parent=1 // pred_check
      _
    $region3: #{tpu_custom_call.1} parent=1 // pred_check_branch
      %11 = sbr.rel (0) target = $region5
    $region4: #{tpu_custom_call.1} parent=1 // pred_region
      %s13 = ssub.s32 16, 16
      %14 = vsyncadd [#allocation5], %s13
      %17 = dma.hbm_to_smem %s0, 16, [#allocation2], [#allocation5]
    $region5: #{tpu_custom_call.1} parent=1 // pred_fallthru
      _
    // Predicated region
    $region6: #{tpu_custom_call.1} parent=1 // pred_check
      _
    $region7: #{tpu_custom_call.1} parent=1 // pred_check_branch
      %19 = sbr.rel (0) target = $region9
    $region8: #{tpu_custom_call.1} parent=1 // pred_region
      %s21 = ssub.s32 1536, 1536
      %22 = vsyncadd [#allocation3], %s21
      %s23 = sshll.u32 [#allocation6], 4
      %s24 = int_to_ptr.vmem [resolvable:$true] %s23
      %29 = dma.hbm_to_vmem [thread:$0]  %s1, 1536, %s24, [#allocation3], 128, 128, 8
    $region9: #{tpu_custom_call.1} parent=1 // pred_fallthru
      _
    // Predicated region
    $region10: #{tpu_custom_call.1} parent=1 // pred_check
      _
    $region11: #{tpu_custom_call.1} parent=1 // pred_check_branch
      %31 = sbr.rel (0) target = $region13
    $region12: #{tpu_custom_call.1} parent=1 // pred_region
      %32 = dma.done [#allocation5], 16
    $region13: #{tpu_custom_call.1} parent=1 // pred_fallthru
      _
    // Predicated region
    $region14: #{tpu_custom_call.1} parent=1 // pred_check
      _
    $region15: #{tpu_custom_call.1} parent=1 // pred_check_branch
      %34 = sbr.rel (0) target = $region17
    $region16: #{tpu_custom_call.1} parent=1 // pred_region
      %35 = dma.done [#allocation3], 1536
    $region17: #{tpu_custom_call.1} parent=1 // pred_fallthru
      _
    %36 = sfence
    %s37 = smul.u32 0, 6
    %s38 = sld [smem:[#allocation2 + %s37]]
    %v39 = vstv %s38
    %vm40 = vcmask 158720
    %41 = vst.msk [vmem:[#allocation7] sm:$0xf] %vm40, %v39
    %42 = vst.msk [vmem:[#allocation7 + $0x14] sm:$0xf] %vm40, %v39
    %v43 = vld [vmem:[#allocation6] sm:$0xff]
    %v44 = vld [vmem:[#allocation6 + $0x8] sm:$0xff]
    %vm45 = vcmask 15360
    %46 = vst.msk [vmem:[#allocation7 + $0x4] sm:$0xff] %vm45, %v39
    %47 = vst.msk [vmem:[#allocation7 + $0xc] sm:$0xff] %vm45, %v39
    %vm48 = vcmask 162960
    %49 = vst.msk [vmem:[#allocation7 + $0x4] sm:$0xff] %vm48, %v39
    %50 = vst.msk [vmem:[#allocation7 + $0xc] sm:$0xff] %vm48, %v39
    %53 = vrot.lane.b32.xlu0 %v43, 2
    %v54 = vpop.permute.xlu0 %53
    %55 = vrot.lane.b32.xlu0 %v44, 2
    %v56 = vpop.permute.xlu0 %55
    %vm59 = vcmask 146448
    %60 = vst.msk [vmem:[#allocation7 + $0x4] sm:$0xff] %vm59, %v54
    %61 = vst.msk [vmem:[#allocation7 + $0xc] sm:$0xff] %vm59, %v56
    %s62 = sadd.s32 %s37, 1
    %s63 = sld [smem:[#allocation2 + %s62]]
    %v64 = vstv %s63
    %s65 = scalar_lea.vmem [#allocation7], 24
    %66 = vst.msk [vmem:[%s65] sm:$0xf] %vm40, %v64
    %67 = vst.msk [vmem:[%s65 + $0x14] sm:$0xf] %vm40, %v64
    %s68 = scalar_lea.vmem [#allocation6], 16
    %v69 = vld [vmem:[%s68] sm:$0xff]
    %v70 = vld [vmem:[%s68 + $0x8] sm:$0xff]
    %71 = vst.msk [vmem:[%s65 + $0x4] sm:$0xff] %vm45, %v64
    %72 = vst.msk [vmem:[%s65 + $0xc] sm:$0xff] %vm45, %v64
    %73 = vst.msk [vmem:[%s65 + $0x4] sm:$0xff] %vm48, %v64
    %74 = vst.msk [vmem:[%s65 + $0xc] sm:$0xff] %vm48, %v64
    %77 = vrot.lane.b32.xlu0 %v69, 2
    %v78 = vpop.permute.xlu0 %77
    %79 = vrot.lane.b32.xlu0 %v70, 2
    %v80 = vpop.permute.xlu0 %79
    %83 = vst.msk [vmem:[%s65 + $0x4] sm:$0xff] %vm59, %v78
    %84 = vst.msk [vmem:[%s65 + $0xc] sm:$0xff] %vm59, %v80
    %s85 = sadd.s32 %s37, 2
    %s86 = sld [smem:[#allocation2 + %s85]]
    %v87 = vstv %s86
    %s88 = scalar_lea.vmem [#allocation7], 48
    %89 = vst.msk [vmem:[%s88] sm:$0xf] %vm40, %v87
    %90 = vst.msk [vmem:[%s88 + $0x14] sm:$0xf] %vm40, %v87
    %s91 = scalar_lea.vmem [#allocation6], 32
    %v92 = vld [vmem:[%s91] sm:$0xff]
    %v93 = vld [vmem:[%s91 + $0x8] sm:$0xff]
    %94 = vst.msk [vmem:[%s88 + $0x4] sm:$0xff] %vm45, %v87
    %95 = vst.msk [vmem:[%s88 + $0xc] sm:$0xff] %vm45, %v87
    %96 = vst.msk [vmem:[%s88 + $0x4] sm:$0xff] %vm48, %v87
    %97 = vst.msk [vmem:[%s88 + $0xc] sm:$0xff] %vm48, %v87
    %100 = vrot.lane.b32.xlu0 %v92, 2
    %v101 = vpop.permute.xlu0 %100
    %102 = vrot.lane.b32.xlu0 %v93, 2
    %v103 = vpop.permute.xlu0 %102
    %106 = vst.msk [vmem:[%s88 + $0x4] sm:$0xff] %vm59, %v101
    %107 = vst.msk [vmem:[%s88 + $0xc] sm:$0xff] %vm59, %v103
    %s108 = sadd.s32 %s37, 3
    %s109 = sld [smem:[#allocation2 + %s108]]
    %v110 = vstv %s109
    %s111 = scalar_lea.vmem [#allocation7], 72
    %112 = vst.msk [vmem:[%s111] sm:$0xf] %vm40, %v110
    %113 = vst.msk [vmem:[%s111 + $0x14] sm:$0xf] %vm40, %v110
    %s114 = scalar_lea.vmem [#allocation6], 48
    %v115 = vld [vmem:[%s114] sm:$0xff]
    %v116 = vld [vmem:[%s114 + $0x8] sm:$0xff]
    %117 = vst.msk [vmem:[%s111 + $0x4] sm:$0xff] %vm45, %v110
    %118 = vst.msk [vmem:[%s111 + $0xc] sm:$0xff] %vm45, %v110
    %119 = vst.msk [vmem:[%s111 + $0x4] sm:$0xff] %vm48, %v110
    %120 = vst.msk [vmem:[%s111 + $0xc] sm:$0xff] %vm48, %v110
    %123 = vrot.lane.b32.xlu0 %v115, 2
    %v124 = vpop.permute.xlu0 %123
    %125 = vrot.lane.b32.xlu0 %v116, 2
    %v126 = vpop.permute.xlu0 %125
    %129 = vst.msk [vmem:[%s111 + $0x4] sm:$0xff] %vm59, %v124
    %130 = vst.msk [vmem:[%s111 + $0xc] sm:$0xff] %vm59, %v126
    %s131 = sadd.s32 %s37, 4
    %s132 = sld [smem:[#allocation2 + %s131]]
    %v133 = vstv %s132
    %s134 = scalar_lea.vmem [#allocation7], 96
    %135 = vst.msk [vmem:[%s134] sm:$0xf] %vm40, %v133
    %136 = vst.msk [vmem:[%s134 + $0x14] sm:$0xf] %vm40, %v133
    %s137 = scalar_lea.vmem [#allocation6], 64
    %v138 = vld [vmem:[%s137] sm:$0xff]
    %v139 = vld [vmem:[%s137 + $0x8] sm:$0xff]
    %140 = vst.msk [vmem:[%s134 + $0x4] sm:$0xff] %vm45, %v133
    %141 = vst.msk [vmem:[%s134 + $0xc] sm:$0xff] %vm45, %v133
    %142 = vst.msk [vmem:[%s134 + $0x4] sm:$0xff] %vm48, %v133
    %143 = vst.msk [vmem:[%s134 + $0xc] sm:$0xff] %vm48, %v133
    %146 = vrot.lane.b32.xlu0 %v138, 2
    %v147 = vpop.permute.xlu0 %146
    %148 = vrot.lane.b32.xlu0 %v139, 2
    %v149 = vpop.permute.xlu0 %148
    %152 = vst.msk [vmem:[%s134 + $0x4] sm:$0xff] %vm59, %v147
    %153 = vst.msk [vmem:[%s134 + $0xc] sm:$0xff] %vm59, %v149
    %s154 = sadd.s32 %s37, 5
    %s155 = sld [smem:[#allocation2 + %s154]]
    %v156 = vstv %s155
    %s157 = scalar_lea.vmem [#allocation7], 120
    %158 = vst.msk [vmem:[%s157] sm:$0xf] %vm40, %v156
    %159 = vst.msk [vmem:[%s157 + $0x14] sm:$0xf] %vm40, %v156
    %s160 = scalar_lea.vmem [#allocation6], 80
    %v161 = vld [vmem:[%s160] sm:$0xff]
    %v162 = vld [vmem:[%s160 + $0x8] sm:$0xff]
    %163 = vst.msk [vmem:[%s157 + $0x4] sm:$0xff] %vm45, %v156
    %164 = vst.msk [vmem:[%s157 + $0xc] sm:$0xff] %vm45, %v156
    %165 = vst.msk [vmem:[%s157 + $0x4] sm:$0xff] %vm48, %v156
    %166 = vst.msk [vmem:[%s157 + $0xc] sm:$0xff] %vm48, %v156
    %169 = vrot.lane.b32.xlu0 %v161, 2
    %v170 = vpop.permute.xlu0 %169
    %171 = vrot.lane.b32.xlu0 %v162, 2
    %v172 = vpop.permute.xlu0 %171
    %175 = vst.msk [vmem:[%s157 + $0x4] sm:$0xff] %vm59, %v170
    %176 = vst.msk [vmem:[%s157 + $0xc] sm:$0xff] %vm59, %v172
    // Predicated region
    $region18: #{tpu_custom_call.1} parent=1 // pred_check
      _
    $region19: #{tpu_custom_call.1} parent=1 // pred_check_branch
      %178 = sbr.rel (0) target = $region21
    $region20: #{tpu_custom_call.1} parent=1 // pred_region
      %s180 = ssub.s32 2304, 2304
      %181 = vsyncadd [#allocation4], %s180
      %s182 = sshll.u32 [#allocation7], 4
      %s183 = int_to_ptr.vmem [resolvable:$true] %s182
      %188 = dma.vmem_to_hbm [thread:$0]  %s183, 2304, %s2, [#allocation4], 128, 128, 8
    $region21: #{tpu_custom_call.1} parent=1 // pred_fallthru
      _
    // Predicated region
    $region22: #{tpu_custom_call.1} parent=1 // pred_check
      _
    $region23: #{tpu_custom_call.1} parent=1 // pred_check_branch
      %190 = sbr.rel (0) target = $region25
    $region24: #{tpu_custom_call.1} parent=1 // pred_region
      %191 = dma.done [#allocation4], 2304
    $region25: #{tpu_custom_call.1} parent=1 // pred_fallthru
      _
    %192 = vsyncpa [#allocation3], 1
    %193 = vsyncpa [#allocation4], 1
    %194 = vsyncpa [#allocation5], 1

</llo_original>
